<compile_context>
chip_gen: v7x
topology: tpu7x:2x2x1
jax: 0.10.0
libtpu: 0.0.40
codegen_flags: <defaults>
</compile_context>

<pallas_src>
import jax
import jax.numpy as jnp
from jax.experimental import pallas as pl
from jax.experimental.pallas import tpu as pltpu


def _smg_kernel(x_ref, fmean_ref, out_ref):
    # x_ref:     (HW, C) theta-layout tile for the current batch element
    # fmean_ref: (HW, C) scrambled-then-transposed EMA mean (resident across grid)
    # out_ref:   (C, C)
    a = x_ref[...] - fmean_ref[...]                                  # (HW, C) centered features

    # Local = A^T A, contraction over HW expressed directly (no a.T temporary).
    local = jax.lax.dot_general(
        a, a,
        dimension_numbers=(((0,), (0,)), ((), ())),
        preferred_element_type=jnp.float32,
    )                                                                # (C, C)

    # diag(A^T A) == column-wise sum of a^2 — no eye mask / (C,C) reduce needed.
    cov = jnp.sum(a * a, axis=0, keepdims=True)                      # (1, C)
    inv = jax.lax.rsqrt(cov)                                         # (1, C)

    # Local / sqrt(cov_i * cov_j) + 1  ==  Local * inv_j * inv_i + 1
    out_ref[...] = local * inv * inv.T + 1.0


def smg_block_forward(x, ema_shadow, *, is_first=True, decay=0.95, first_decay=0.0):
    """x: (B, C, H, W) float32.  ema_shadow: (H*W, C) EMA_FM state (zeros at init).

    Returns (correlation (B, C, C) float32, new_ema_shadow (H*W, C)).
    """
    b, c, h, w = x.shape
    hw = h * w
    x_flat = x.reshape(b, c, hw).astype(jnp.float32)                 # (B, C, HW)

    # EMA_FM.update (torch.no_grad stateful glue): batch mean without transposing
    # the full tensor just for the mean — only a tiny (C,HW)->(HW,C) transpose.
    average = jnp.mean(x_flat, axis=0).T                             # (HW, C)
    d = first_decay if is_first else decay
    f_mean = (1.0 - d) * average + d * ema_shadow                    # (HW, C)
    new_shadow = f_mean

    # PyTorch: f_mean.view(1, c, hw) is a raw row-major reshape (scramble), and the
    # right matmul operand subtracts its transpose.  Kernel works in theta layout,
    # so pre-transpose the scrambled mean back to (HW, C).
    f_mean_theta = f_mean.reshape(c, hw).T                           # (HW, C)

    # Kernel input: theta layout, C on the lane axis.
    theta_x = jnp.transpose(x_flat, (0, 2, 1))                       # (B, HW, C)

    corr = pl.pallas_call(
        _smg_kernel,
        out_shape=jax.ShapeDtypeStruct((b, c, c), jnp.float32),
        grid_spec=pltpu.PrefetchScalarGridSpec(
            num_scalar_prefetch=0,
            grid=(b,),
            in_specs=[
                pl.BlockSpec((None, hw, c), lambda i: (i, 0, 0)),    # squeezed batch dim
                pl.BlockSpec((hw, c), lambda i: (0, 0)),             # broadcast mean
            ],
            out_specs=pl.BlockSpec((None, c, c), lambda i: (i, 0, 0)),
        ),
        compiler_params=pltpu.CompilerParams(
            dimension_semantics=("parallel",),
        ),
    )(theta_x, f_mean_theta)

    return corr, new_shadow


def _reference_forward(x, ema_shadow, *, is_first=True, decay=0.95, first_decay=0.0):
    # Pure-JAX reference mirroring the PyTorch code line-by-line.
    b, c, h, w = x.shape
    hw = h * w
    x_flat = x.reshape(b, c, hw)
    theta_x = jnp.transpose(x_flat, (0, 2, 1))
    average = jnp.mean(theta_x, axis=0)
    d = first_decay if is_first else decay
    f_mean = (1.0 - d) * average + d * ema_shadow
    f_mean_r = f_mean.reshape(1, c, hw)
    f_mean_t = jnp.transpose(f_mean_r, (0, 2, 1))
    local = jnp.matmul(x_flat - f_mean_r, theta_x - f_mean_t)        # (b, c, c)
    eye = jnp.eye(c)[None]
    cov = jnp.sum(local * eye, axis=2).reshape(b, c, 1)
    norm = jnp.sqrt(jnp.matmul(cov, jnp.transpose(cov, (0, 2, 1))))
    return local / norm + 1.0


if __name__ == "__main__":
    # Module config (small, TPU-friendly): channel_size=128, f_map_size=8*8=64.
    B, C, H, W = 2, 128, 8, 8

    key = jax.random.PRNGKey(0)
    x = jax.random.normal(key, (B, C, H, W), dtype=jnp.float32)

    # EMA_FM registers Init_FM = zeros((f_map_size, channel_size)); is_first=True.
    ema_shadow = jnp.zeros((H * W, C), dtype=jnp.float32)

    corr, _ = smg_block_forward(x, ema_shadow, is_first=True, decay=0.95, first_decay=0.0)
    corr = jax.block_until_ready(corr)

    ref = _reference_forward(x, ema_shadow, is_first=True, decay=0.95, first_decay=0.0)
    assert corr.shape == (B, C, C)
    assert jnp.allclose(corr, ref, rtol=2e-2, atol=2e-2), "Pallas result mismatch vs reference"

    print("KERNEL_OK")
</pallas_src>

<mosaic_0001>
module attributes {stable_mosaic.version = 11 : i64} {
  func.func @_smg_kernel(%arg0: i32, %arg1: memref<1x64x128xf32, #tpu.memory_space<vmem>>, %arg2: memref<64x128xf32, #tpu.memory_space<vmem>>, %arg3: memref<1x128x128xf32, #tpu.memory_space<vmem>>) attributes {dimension_semantics = [#tpu.dimension_semantics<parallel>], iteration_bounds = array<i64: 2>, scalar_prefetch = 0 : i64, scratch_operands = 0 : i64, tpu.core_type = #tpu.core_type<tc>, window_params = [{transform_indices = @transform_0, window_bounds = array<i64: 1, 64, 128>}, {pipeline_mode = #tpu.pipeline_mode<synchronous>, transform_indices = @transform_1, window_bounds = array<i64: 64, 128>}, {transform_indices = @transform_2, window_bounds = array<i64: 1, 128, 128>}]} {
    %c0 = arith.constant 0 : index
    %c0_0 = arith.constant 0 : index
    %c0_1 = arith.constant 0 : index
    %0 = vector.load %arg1[%c0, %c0_0, %c0_1] : memref<1x64x128xf32, #tpu.memory_space<vmem>>, vector<1x64x128xf32>
    %1 = vector.shape_cast %0 : vector<1x64x128xf32> to vector<64x128xf32>
    %c0_2 = arith.constant 0 : index
    %c0_3 = arith.constant 0 : index
    %2 = vector.load %arg2[%c0_2, %c0_3] : memref<64x128xf32, #tpu.memory_space<vmem>>, vector<64x128xf32>
    %3 = arith.subf %1, %2 : vector<64x128xf32>
    %cst = arith.constant dense<0.000000e+00> : vector<128x128xf32>
    %4 = tpu.matmul %3, %3, %cst {dimension_numbers = #tpu.dot_dimension_numbers<[0], [0], [1], [1], [0, 1, 1, 1], [], []>} : vector<64x128xf32>, vector<64x128xf32>, vector<128x128xf32> -> vector<128x128xf32>
    %5 = arith.mulf %3, %3 : vector<64x128xf32>
    %cst_4 = arith.constant dense<0.000000e+00> : vector<128xf32>
    %6 = vector.multi_reduction <add>, %5, %cst_4 [0] : vector<64x128xf32> to vector<128xf32>
    %7 = vector.shape_cast %6 : vector<128xf32> to vector<1x128xf32>
    %8 = math.rsqrt %7 : vector<1x128xf32>
    %9 = vector.broadcast %8 : vector<1x128xf32> to vector<128x128xf32>
    %10 = arith.mulf %4, %9 : vector<128x128xf32>
    %11 = tpu.transpose %8, [1, 0] : vector<1x128xf32> -> vector<128x1xf32>
    %12 = vector.broadcast %11 : vector<128x1xf32> to vector<128x128xf32>
    %13 = arith.mulf %10, %12 : vector<128x128xf32>
    %cst_5 = arith.constant 1.000000e+00 : f32
    %14 = vector.broadcast %cst_5 : f32 to vector<128x128xf32>
    %15 = arith.addf %13, %14 : vector<128x128xf32>
    %c0_6 = arith.constant 0 : index
    %c0_7 = arith.constant 0 : index
    %c0_8 = arith.constant 0 : index
    %16 = vector.load %arg3[%c0_6, %c0_7, %c0_8] : memref<1x128x128xf32, #tpu.memory_space<vmem>>, vector<1x128x128xf32>
    %17 = vector.shape_cast %16 : vector<1x128x128xf32> to vector<128x128xf32>
    %18 = vector.shape_cast %15 : vector<128x128xf32> to vector<1x128x128xf32>
    tpu.vector_store %arg3[%c0_6, %c0_7, %c0_8], %18 {strides = array<i32>} : memref<1x128x128xf32, #tpu.memory_space<vmem>>, vector<1x128x128xf32>,
    return
  }
  func.func @transform_0(%arg0: i32) -> (i32, i32, i32) {
    %c0_i32 = arith.constant 0 : i32
    %c0_i32_0 = arith.constant 0 : i32
    %c0_i32_1 = arith.constant 0 : i32
    return %arg0, %c0_i32, %c0_i32_0 : i32, i32, i32
  }
  func.func @transform_1(%arg0: i32) -> (i32, i32) {
    %c0_i32 = arith.constant 0 : i32
    %c0_i32_0 = arith.constant 0 : i32
    %c0_i32_1 = arith.constant 0 : i32
    return %c0_i32, %c0_i32_0 : i32, i32
  }
  func.func @transform_2(%arg0: i32) -> (i32, i32, i32) {
    %c0_i32 = arith.constant 0 : i32
    %c0_i32_0 = arith.constant 0 : i32
    %c0_i32_1 = arith.constant 0 : i32
    return %arg0, %c0_i32, %c0_i32_0 : i32, i32, i32
  }
}

</mosaic_0001>

<llo_original>
// kernel: tpu_custom_call.1
$region0: #{tpu_custom_call.1}
  #allocation0 [shape = 'u32[]', space=smem, size = 0x4, offset = 0x4, fixed_abs, tag = 'smem constant byte address 0x4 - core index']
  #allocation1 [shape = 'u32[144,128]{1,0:T(1,128)}', space=vmem, size = 0x12000, scoped, tag = 'internal scratch']
  %s0 = inlined_call_operand.hbm [shape: f32[2,64,128], index: 0, kind: input, shape index: {}]
  %s1 = inlined_call_operand.hbm [shape: f32[64,128], index: 1, kind: input, shape index: {}]
  %s2 = inlined_call_operand.hbm [shape: f32[2,128,128], index: 2, kind: output, shape index: {}]
  %s3 = sld [smem:[#allocation0]]
  $region49: #{tpu_custom_call.1} parent=0
    _
  %s5 = ssub.s32 1, %s3
  %s6 = scalar_select 0, %s5, %s3
  $region1: #{tpu_custom_call.1} parent=0
    #allocation2 [shape = 'u8[65536]{0}', space=vmem, size = 0x10000, scoped, tag = 'input window, operand 0']
    #allocation3 [shape = 's32[2]{0}', space=sflag, size = 0x8, scoped, tag = 'scoped memory for tpu_custom_call.1']
    #allocation4 [shape = 's32[2]{0}', space=sflag, size = 0x8, scoped, tag = 'scoped memory for tpu_custom_call.1']
    #allocation5 [shape = 'u8[32768]{0}', space=vmem, size = 0x8000, scoped, tag = 'input window, operand 1, single buffered']
    #allocation6 [shape = 's32[1]{0}', space=sflag, size = 0x4, scoped, tag = 'scoped memory for tpu_custom_call.1']
    #allocation7 [shape = 'u8[131072]{0}', space=vmem, size = 0x20000, scoped, tag = 'output window, operand 0']
    %7 = vsyncpa [#allocation3], 0
    %s8 = scalar_lea.sflag [#allocation3], 1
    %9 = vsyncpa %s8, 0
    %10 = vsyncpa [#allocation6], 0
    %11 = vsyncpa [#allocation4], 0
    %s12 = scalar_lea.sflag [#allocation4], 1
    %13 = vsyncpa %s12, 0
    loop: start=0, step=1, limit=4
    $region2: #{tpu_custom_call.1} parent=1 // loop_pre_header
      _
    $region3: #{tpu_custom_call.1} parent=1 // loop_header
      %s15 = sphi 0, %s19
      %p16 = scmp.ge.s32.totalorder %s15, 4
      %s25 = sphi 0, %s27
      %s28 = sphi 0, %s25
      %s29 = sphi 0, %s28
      %s45 = sphi 0, %s29
      %s49 = sphi 0, %s49
      %s51 = sphi 0, %s49
      %s52 = sphi 0, %s51
      %s66 = sphi 0, %s52
      %s72 = sphi 0, %s74
      %s75 = sphi 0, %s72
      %s76 = sphi 0, %s75
      %s92 = sphi 0, %s76
    $region4: #{tpu_custom_call.1} parent=1 // loop_header_branch
      %18 = sbr.rel (%p16) target = $region8
    $region5: #{tpu_custom_call.1} parent=1 // loop_body
      %s20 = ssub.s32 %s15, 1
      %s21 = ssub.s32 %s15, 2
      %s22 = sadd.s32 %s15, 1
      %s23 = ssub.s32 %s15, %s22
      %p24 = scmp.eq.s32.totalorder %s23, 0
      %s26 = sadd.s32 %s25, 1
      %s27 = scalar_select %p24, %s25, %s26
      %p30 = pneg %p24
      %p31 = scmp.eq.s32.totalorder %s15, 1
      %p32 = por %p30, %p31
      %p33 = scmp.ne.s32.totalorder %s25, %s28
      %p34 = scmp.eq.s32.totalorder %s15, 0
      %p35 = por %p33, %p34
      %p36 = scmp.ne.s32.totalorder %s25, %s28
      %p37 = scmp.eq.s32.totalorder %s20, 1
      %p38 = por %p36, %p37
      %p39 = scmp.ne.s32.totalorder %s28, %s29
      %p40 = scmp.eq.s32.totalorder %s20, 0
      %p41 = por %p39, %p40
      %p42 = scmp.ne.s32.totalorder %s28, %s29
      %p43 = scmp.eq.s32.totalorder %s21, 1
      %p44 = por %p42, %p43
      %p46 = scmp.ne.s32.totalorder %s29, %s45
      %p47 = scmp.eq.s32.totalorder %s21, 0
      %p48 = por %p46, %p47
      %s50 = sadd.s32 %s49, 1
      %p53 = scmp.eq.s32.totalorder %s15, 1
      %p54 = scmp.ne.s32.totalorder %s49, %s51
      %p55 = scmp.eq.s32.totalorder %s15, 0
      %p56 = por %p54, %p55
      %p57 = scmp.ne.s32.totalorder %s49, %s51
      %p58 = scmp.eq.s32.totalorder %s20, 1
      %p59 = por %p57, %p58
      %p60 = scmp.ne.s32.totalorder %s51, %s52
      %p61 = scmp.eq.s32.totalorder %s20, 0
      %p62 = por %p60, %p61
      %p63 = scmp.ne.s32.totalorder %s51, %s52
      %p64 = scmp.eq.s32.totalorder %s21, 1
      %p65 = por %p63, %p64
      %p67 = scmp.ne.s32.totalorder %s52, %s66
      %p68 = scmp.eq.s32.totalorder %s21, 0
      %p69 = por %p67, %p68
      %s70 = ssub.s32 %s15, %s22
      %p71 = scmp.eq.s32.totalorder %s70, 0
      %s73 = sadd.s32 %s72, 1
      %s74 = scalar_select %p71, %s72, %s73
      %p77 = pneg %p71
      %p78 = scmp.eq.s32.totalorder %s15, 1
      %p79 = por %p77, %p78
      %p80 = scmp.ne.s32.totalorder %s72, %s75
      %p81 = scmp.eq.s32.totalorder %s15, 0
      %p82 = por %p80, %p81
      %p83 = scmp.ne.s32.totalorder %s72, %s75
      %p84 = scmp.eq.s32.totalorder %s20, 1
      %p85 = por %p83, %p84
      %p86 = scmp.ne.s32.totalorder %s75, %s76
      %p87 = scmp.eq.s32.totalorder %s20, 0
      %p88 = por %p86, %p87
      %p89 = scmp.ne.s32.totalorder %s75, %s76
      %p90 = scmp.eq.s32.totalorder %s21, 1
      %p91 = por %p89, %p90
      %p93 = scmp.ne.s32.totalorder %s76, %s92
      %p94 = scmp.eq.s32.totalorder %s21, 0
      %p95 = por %p93, %p94
      %p96 = scmp.le.s32.totalorder 1, %s15
      %p97 = scmp.lt.s32.totalorder %s15, 3
      %p98 = pnand %p96, %p97
      %p99 = pneg %p98
      // Predicated region
      $region9: #{tpu_custom_call.1} parent=5 // pred_check
        _
      $region10: #{tpu_custom_call.1} parent=5 // pred_check_branch
        %101 = sbr.rel (%p98) target = $region12
      $region11: #{tpu_custom_call.1} parent=5 // pred_region
        %s102 = ssub.s32 %s15, 1
        // Predicated region
        $region13: #{tpu_custom_call.1} parent=11 // pred_check
          %p103 = pneg %p62
        $region14: #{tpu_custom_call.1} parent=11 // pred_check_branch
          %105 = sbr.rel (%p103) target = $region16
        $region15: #{tpu_custom_call.1} parent=11 // pred_region
          %s107 = ssub.s32 1024, 1024
          %108 = vsyncadd [#allocation6], %s107
          %s109 = sshll.u32 [#allocation5], 4
          %s110 = int_to_ptr.vmem [resolvable:$true] %s109
          %115 = dma.hbm_to_vmem [thread:$0]  %s1, 1024, %s110, [#allocation6], 128, 128, 8
        $region16: #{tpu_custom_call.1} parent=11 // pred_fallthru
          _
      $region12: #{tpu_custom_call.1} parent=5 // pred_fallthru
        _
      %p116 = scmp.lt.s32.totalorder %s15, 2
      // Predicated region
      $region17: #{tpu_custom_call.1} parent=5 // pred_check
        %p117 = pneg %p116
      $region18: #{tpu_custom_call.1} parent=5 // pred_check_branch
        %119 = sbr.rel (%p117) target = $region20
      $region19: #{tpu_custom_call.1} parent=5 // pred_region
        // Predicated region
        $region21: #{tpu_custom_call.1} parent=19 // pred_check
          %p120 = pneg %p35
        $region22: #{tpu_custom_call.1} parent=19 // pred_check_branch
          %122 = sbr.rel (%p120) target = $region24
        $region23: #{tpu_custom_call.1} parent=19 // pred_region
          %s123 = sand.u32 %s25, 1
          %s124 = scalar_lea.sflag [#allocation3], %s123
          %s125 = sand.u32 %s25, 1
          %s126 = smul.addr %s125, 64
          %s127 = scalar_lea.vmem [#allocation2], %s126
          %s129 = ssub.s32 1024, 1024
          %130 = vsyncadd %s124, %s129
          %s131 = smul.addr %s15, 8
          %s132 = smul.addr %s131, 128
          %s133 = scalar_lea.hbm %s0, %s132
          %s134 = sshll.u32 %s127, 4
          %s135 = int_to_ptr.vmem [resolvable:$true] %s134
          %140 = dma.hbm_to_vmem [thread:$0]  %s133, 1024, %s135, %s124, 128, 128, 8
        $region24: #{tpu_custom_call.1} parent=19 // pred_fallthru
          _
      $region20: #{tpu_custom_call.1} parent=5 // pred_fallthru
        _
      %p141 = scmp.le.s32.totalorder 1, %s15
      %p142 = scmp.lt.s32.totalorder %s15, 3
      %p143 = pnand %p141, %p142
      %p144 = pneg %p143
      // Predicated region
      $region25: #{tpu_custom_call.1} parent=5 // pred_check
        _
      $region26: #{tpu_custom_call.1} parent=5 // pred_check_branch
        %146 = sbr.rel (%p143) target = $region28
      $region27: #{tpu_custom_call.1} parent=5 // pred_region
        %s147 = ssub.s32 %s15, 1
        %s148 = sand.u32 %s28, 1
        %s149 = scalar_lea.sflag [#allocation3], %s148
        %s150 = sand.u32 %s28, 1
        %s151 = smul.addr %s150, 64
        %s152 = scalar_lea.vmem [#allocation2], %s151
        // Predicated region
        $region29: #{tpu_custom_call.1} parent=27 // pred_check
          %p153 = pneg %p41
        $region30: #{tpu_custom_call.1} parent=27 // pred_check_branch
          %155 = sbr.rel (%p153) target = $region32
        $region31: #{tpu_custom_call.1} parent=27 // pred_region
          %156 = dma.done %s149, 1024
        $region32: #{tpu_custom_call.1} parent=27 // pred_fallthru
          _
        // Predicated region
        $region33: #{tpu_custom_call.1} parent=27 // pred_check
          %p157 = pneg %p62
        $region34: #{tpu_custom_call.1} parent=27 // pred_check_branch
          %159 = sbr.rel (%p157) target = $region36
        $region35: #{tpu_custom_call.1} parent=27 // pred_region
          %160 = dma.done [#allocation6], 1024
        $region36: #{tpu_custom_call.1} parent=27 // pred_fallthru
          _
        %s161 = sand.u32 %s28, 1
        %s162 = scalar_lea.sflag [#allocation3], %s161
        %s163 = sand.u32 %s28, 1
        %s164 = smul.addr %s163, 64
        %s165 = scalar_lea.vmem [#allocation2], %s164
        %p166 = pneg %p41
        %p167 = pneg %p38
        %p168 = pneg %p62
        %p169 = pneg %p59
        %p170 = pneg %p88
        %p171 = pneg %p85
        %s172 = sand.u32 %s75, 1
        %s173 = scalar_lea.sflag [#allocation4], %s172
        %s174 = sand.u32 %s75, 1
        %s175 = smul.addr %s174, 128
        %s176 = scalar_lea.vmem [#allocation7], %s175
        %v177 = vld [vmem:[%s152] sm:$0xff]
        %v178 = vld [vmem:[%s152 + $0x8] sm:$0xff]
        %v179 = vld [vmem:[%s152 + $0x10] sm:$0xff]
        %v180 = vld [vmem:[%s152 + $0x18] sm:$0xff]
        %v181 = vld [vmem:[%s152 + $0x20] sm:$0xff]
        %v182 = vld [vmem:[%s152 + $0x28] sm:$0xff]
        %v183 = vld [vmem:[%s152 + $0x30] sm:$0xff]
        %v184 = vld [vmem:[%s152 + $0x38] sm:$0xff]
        %v185 = vld [vmem:[#allocation5] sm:$0xff]
        %v186 = vld [vmem:[#allocation5 + $0x8] sm:$0xff]
        %v187 = vld [vmem:[#allocation5 + $0x10] sm:$0xff]
        %v188 = vld [vmem:[#allocation5 + $0x18] sm:$0xff]
        %v189 = vld [vmem:[#allocation5 + $0x20] sm:$0xff]
        %v190 = vld [vmem:[#allocation5 + $0x28] sm:$0xff]
        %v191 = vld [vmem:[#allocation5 + $0x30] sm:$0xff]
        %v192 = vld [vmem:[#allocation5 + $0x38] sm:$0xff]
        %v193 = vsub.f32 %v177, %v185
        %v194 = vsub.f32 %v178, %v186
        %v195 = vsub.f32 %v179, %v187
        %v196 = vsub.f32 %v180, %v188
        %v197 = vsub.f32 %v181, %v189
        %v198 = vsub.f32 %v182, %v190
        %v199 = vsub.f32 %v183, %v191
        %v200 = vsub.f32 %v184, %v192
        %201 = vxpose.xlu0.b32.start [1/16] %v193, 128
        %202 = vxpose.xlu0.b32.cont [2/16] %v194, 128
        %203 = vxpose.xlu0.b32.cont [3/16] %v195, 128
        %204 = vxpose.xlu0.b32.cont [4/16] %v196, 128
        %205 = vxpose.xlu0.b32.cont [5/16] %v197, 128
        %206 = vxpose.xlu0.b32.cont [6/16] %v198, 128
        %207 = vxpose.xlu0.b32.cont [7/16] %v199, 128
        %208 = vxpose.xlu0.b32.cont [8/16] %v200, 128
        %209 = vxpose.xlu0.b32.cont [9/16] 0.0, 128
        %210 = vxpose.xlu0.b32.cont [10/16] 0.0, 128
        %211 = vxpose.xlu0.b32.cont [11/16] 0.0, 128
        %212 = vxpose.xlu0.b32.cont [12/16] 0.0, 128
        %213 = vxpose.xlu0.b32.cont [13/16] 0.0, 128
        %214 = vxpose.xlu0.b32.cont [14/16] 0.0, 128
        %215 = vxpose.xlu0.b32.cont [15/16] 0.0, 128
        %216 = vxpose.xlu0.b32.end [16/16] 0.0, 128
        %v217 = vpop.trf.xlu0
        %v218 = vpop.trf.xlu0
        %v219 = vpop.trf.xlu0
        %v220 = vpop.trf.xlu0
        %v221 = vpop.trf.xlu0
        %v222 = vpop.trf.xlu0
        %v223 = vpop.trf.xlu0
        %v224 = vpop.trf.xlu0
        %v225 = vpop.trf.xlu0
        %v226 = vpop.trf.xlu0
        %v227 = vpop.trf.xlu0
        %v228 = vpop.trf.xlu0
        %v229 = vpop.trf.xlu0
        %v230 = vpop.trf.xlu0
        %v231 = vpop.trf.xlu0
        %v232 = vpop.trf.xlu0
        %vm233 = vcmask 523264
        %v235 = vsel %vm233, %v217, 0
        %v238 = vsel %vm233, %v218, 0
        %v241 = vsel %vm233, %v219, 0
        %v244 = vsel %vm233, %v220, 0
        %v247 = vsel %vm233, %v221, 0
        %v250 = vsel %vm233, %v222, 0
        %v253 = vsel %vm233, %v223, 0
        %v256 = vsel %vm233, %v224, 0
        %v259 = vsel %vm233, %v225, 0
        %v262 = vsel %vm233, %v226, 0
        %v265 = vsel %vm233, %v227, 0
        %v268 = vsel %vm233, %v228, 0
        %v271 = vsel %vm233, %v229, 0
        %v274 = vsel %vm233, %v230, 0
        %v277 = vsel %vm233, %v231, 0
        %v280 = vsel %vm233, %v232, 0
        %282 = vmatprep.subr.mxu0 0.0
        %283 = vmatpush1.msra.mxu0 %v193
        %284 = vmatprep.subr.mxu0 0.0
        %285 = vmatpush1.msra.mxu0 %v194
        %286 = vmatprep.subr.mxu0 0.0
        %287 = vmatpush1.msra.mxu0 %v195
        %288 = vmatprep.subr.mxu0 0.0
        %289 = vmatpush1.msra.mxu0 %v196
        %290 = vmatprep.subr.mxu0 0.0
        %291 = vmatpush1.msra.mxu0 %v197
        %292 = vmatprep.subr.mxu0 0.0
        %293 = vmatpush1.msra.mxu0 %v198
        %294 = vmatprep.subr.mxu0 0.0
        %295 = vmatpush1.msra.mxu0 %v199
        %296 = vmatprep.subr.mxu0 0.0
        %297 = vmatpush1.msra.mxu0 %v200
        %298 = vmatprep.subr.mxu0 0.0
        %299 = vmatpush1.msra.mxu0 0.0
        %300 = vmatprep.subr.mxu0 0.0
        %301 = vmatpush1.msra.mxu0 0.0
        %302 = vmatprep.subr.mxu0 0.0
        %303 = vmatpush1.msra.mxu0 0.0
        %304 = vmatprep.subr.mxu0 0.0
        %305 = vmatpush1.msra.mxu0 0.0
        %306 = vmatprep.subr.mxu0 0.0
        %307 = vmatpush1.msra.mxu0 0.0
        %308 = vmatprep.subr.mxu0 0.0
        %309 = vmatpush1.msra.mxu0 0.0
        %310 = vmatprep.subr.mxu0 0.0
        %311 = vmatpush1.msra.mxu0 0.0
        %312 = vmatprep.subr.mxu0 0.0
        %313 = vmatpush1.msra.mxu0 0.0
        %314 = vmatprep.subr.mxu0 0.0
        %315 = vmatpush1.msra.mxu0 0.0
        %316 = vmatprep.subr.mxu0 0.0
        %317 = vmatpush1.msra.mxu0 0.0
        %318 = vmatprep.subr.mxu0 0.0
        %319 = vmatpush1.msra.mxu0 0.0
        %320 = vmatprep.subr.mxu0 0.0
        %321 = vmatpush1.msra.mxu0 0.0
        %322 = vmatprep.subr.mxu0 0.0
        %323 = vmatpush1.msra.mxu0 0.0
        %324 = vmatprep.subr.mxu0 0.0
        %325 = vmatpush1.msra.mxu0 0.0
        %326 = vmatprep.subr.mxu0 0.0
        %327 = vmatpush1.msra.mxu0 0.0
        %328 = vmatprep.subr.mxu0 0.0
        %329 = vmatpush1.msra.mxu0 0.0
        %330 = vmatprep.subr.mxu0 0.0
        %331 = vmatpush1.msra.mxu0 0.0
        %332 = vmatprep.subr.mxu0 0.0
        %333 = vmatpush1.msra.mxu0 0.0
        %334 = vmatprep.subr.mxu0 0.0
        %335 = vmatpush1.msra.mxu0 0.0
        %336 = vmatprep.subr.mxu0 0.0
        %337 = vmatpush1.msra.mxu0 0.0
        %338 = vmatprep.subr.mxu0 0.0
        %339 = vmatpush1.msra.mxu0 0.0
        %340 = vmatprep.subr.mxu0 0.0
        %341 = vmatpush1.msra.mxu0 0.0
        %342 = vmatprep.subr.mxu0 0.0
        %343 = vmatpush1.msra.mxu0 0.0
        %344 = vmatprep.subr.mxu0 0.0
        %345 = vmatpush1.msra.mxu0 0.0
        %346 = vmatprep.mubr.f32.mxu0 0.0
        %347 = vmatmul.mubr.f32.gmra.mrb[0].mxu0 %v235
        %v348 = vpop.f32.mrb[0].mxu0
        %v349 = vadd.f32 0.0, %v348
        %v350 = vpop.f32.mrb[0].mxu0
        %351 = vmatprep.mubr.f32.mxu0 0.0
        %352 = vmatmul.mubr.f32.gmra.mrb[0].mxu0 %v238
        %v353 = vpop.f32.mrb[0].mxu0
        %v354 = vadd.f32 0.0, %v353
        %v355 = vpop.f32.mrb[0].mxu0
        %356 = vmatprep.mubr.f32.mxu0 0.0
        %357 = vmatmul.mubr.f32.gmra.mrb[0].mxu0 %v241
        %v358 = vpop.f32.mrb[0].mxu0
        %v359 = vadd.f32 0.0, %v358
        %v360 = vpop.f32.mrb[0].mxu0
        %361 = vmatprep.mubr.f32.mxu0 0.0
        %362 = vmatmul.mubr.f32.gmra.mrb[0].mxu0 %v244
        %v363 = vpop.f32.mrb[0].mxu0
        %v364 = vadd.f32 0.0, %v363
        %v365 = vpop.f32.mrb[0].mxu0
        %366 = vmatprep.mubr.f32.mxu0 0.0
        %367 = vmatmul.mubr.f32.gmra.mrb[0].mxu0 %v247
        %v368 = vpop.f32.mrb[0].mxu0
        %v369 = vadd.f32 0.0, %v368
        %v370 = vpop.f32.mrb[0].mxu0
        %371 = vmatprep.mubr.f32.mxu0 0.0
        %372 = vmatmul.mubr.f32.gmra.mrb[0].mxu0 %v250
        %v373 = vpop.f32.mrb[0].mxu0
        %v374 = vadd.f32 0.0, %v373
        %v375 = vpop.f32.mrb[0].mxu0
        %376 = vmatprep.mubr.f32.mxu0 0.0
        %377 = vmatmul.mubr.f32.gmra.mrb[0].mxu0 %v253
        %v378 = vpop.f32.mrb[0].mxu0
        %v379 = vadd.f32 0.0, %v378
        %v380 = vpop.f32.mrb[0].mxu0
        %381 = vmatprep.mubr.f32.mxu0 0.0
        %382 = vmatmul.mubr.f32.gmra.mrb[0].mxu0 %v256
        %v383 = vpop.f32.mrb[0].mxu0
        %v384 = vadd.f32 0.0, %v383
        %v385 = vpop.f32.mrb[0].mxu0
        %386 = vmatprep.mubr.f32.mxu0 0.0
        %387 = vmatmul.mubr.f32.gmra.mrb[0].mxu0 %v259
        %v388 = vpop.f32.mrb[0].mxu0
        %v389 = vadd.f32 0.0, %v388
        %v390 = vpop.f32.mrb[0].mxu0
        %391 = vmatprep.mubr.f32.mxu0 0.0
        %392 = vmatmul.mubr.f32.gmra.mrb[0].mxu0 %v262
        %v393 = vpop.f32.mrb[0].mxu0
        %v394 = vadd.f32 0.0, %v393
        %v395 = vpop.f32.mrb[0].mxu0
        %396 = vmatprep.mubr.f32.mxu0 0.0
        %397 = vmatmul.mubr.f32.gmra.mrb[0].mxu0 %v265
        %v398 = vpop.f32.mrb[0].mxu0
        %v399 = vadd.f32 0.0, %v398
        %v400 = vpop.f32.mrb[0].mxu0
        %401 = vmatprep.mubr.f32.mxu0 0.0
        %402 = vmatmul.mubr.f32.gmra.mrb[0].mxu0 %v268
        %v403 = vpop.f32.mrb[0].mxu0
        %v404 = vadd.f32 0.0, %v403
        %v405 = vpop.f32.mrb[0].mxu0
        %406 = vmatprep.mubr.f32.mxu0 0.0
        %407 = vmatmul.mubr.f32.gmra.mrb[0].mxu0 %v271
        %v408 = vpop.f32.mrb[0].mxu0
        %v409 = vadd.f32 0.0, %v408
        %v410 = vpop.f32.mrb[0].mxu0
        %411 = vmatprep.mubr.f32.mxu0 0.0
        %412 = vmatmul.mubr.f32.gmra.mrb[0].mxu0 %v274
        %v413 = vpop.f32.mrb[0].mxu0
        %v414 = vadd.f32 0.0, %v413
        %v415 = vpop.f32.mrb[0].mxu0
        %416 = vmatprep.mubr.f32.mxu0 0.0
        %417 = vmatmul.mubr.f32.gmra.mrb[0].mxu0 %v277
        %v418 = vpop.f32.mrb[0].mxu0
        %v419 = vadd.f32 0.0, %v418
        %v420 = vpop.f32.mrb[0].mxu0
        %421 = vmatprep.mubr.f32.mxu0 0.0
        %422 = vmatmul.mubr.f32.gmra.mrb[0].mxu0 %v280
        %v423 = vpop.f32.mrb[0].mxu0
        %v424 = vadd.f32 0.0, %v423
        %v425 = vpop.f32.mrb[0].mxu0
        %426 = vdwg.mxu0
        %v427 = vmul.f32 %v193, %v193
        %v428 = vmul.f32 %v194, %v194
        %v429 = vmul.f32 %v195, %v195
        %v430 = vmul.f32 %v196, %v196
        %v431 = vmul.f32 %v197, %v197
        %v432 = vmul.f32 %v198, %v198
        %v433 = vmul.f32 %v199, %v199
        %v434 = vmul.f32 %v200, %v200
        %v435 = vadd.f32 %v427, %v428
        %v436 = vadd.f32 %v435, %v429
        %v437 = vadd.f32 %v436, %v430
        %v438 = vadd.f32 %v437, %v431
        %v439 = vadd.f32 %v438, %v432
        %v440 = vadd.f32 %v439, %v433
        %v441 = vadd.f32 %v440, %v434
        %v442 = vrot.slane %v441, 4
        %v443 = vadd.f32 %v441, %v442
        %v444 = vrot.slane %v443, 2
        %v445 = vadd.f32 %v443, %v444
        %v446 = vrot.slane %v445, 1
        %v447 = vadd.f32 %v445, %v446
        %v448 = vrsqrt.pop %v447
        %v449 = vmul.f32 %v349, %v448
        %v450 = vmul.f32 %v354, %v448
        %v451 = vmul.f32 %v359, %v448
        %v452 = vmul.f32 %v364, %v448
        %v453 = vmul.f32 %v369, %v448
        %v454 = vmul.f32 %v374, %v448
        %v455 = vmul.f32 %v379, %v448
        %v456 = vmul.f32 %v384, %v448
        %v457 = vmul.f32 %v389, %v448
        %v458 = vmul.f32 %v394, %v448
        %v459 = vmul.f32 %v399, %v448
        %v460 = vmul.f32 %v404, %v448
        %v461 = vmul.f32 %v409, %v448
        %v462 = vmul.f32 %v414, %v448
        %v463 = vmul.f32 %v419, %v448
        %v464 = vmul.f32 %v424, %v448
        %465 = vxpose.xlu0.b32.start [1/16] %v448, 128
        %466 = vxpose.xlu0.b32.cont [2/16] 0.0, 128
        %467 = vxpose.xlu0.b32.cont [3/16] 0.0, 128
        %468 = vxpose.xlu0.b32.cont [4/16] 0.0, 128
        %469 = vxpose.xlu0.b32.cont [5/16] 0.0, 128
        %470 = vxpose.xlu0.b32.cont [6/16] 0.0, 128
        %471 = vxpose.xlu0.b32.cont [7/16] 0.0, 128
        %472 = vxpose.xlu0.b32.cont [8/16] 0.0, 128
        %473 = vxpose.xlu0.b32.cont [9/16] 0.0, 128
        %474 = vxpose.xlu0.b32.cont [10/16] 0.0, 128
        %475 = vxpose.xlu0.b32.cont [11/16] 0.0, 128
        %476 = vxpose.xlu0.b32.cont [12/16] 0.0, 128
        %477 = vxpose.xlu0.b32.cont [13/16] 0.0, 128
        %478 = vxpose.xlu0.b32.cont [14/16] 0.0, 128
        %479 = vxpose.xlu0.b32.cont [15/16] 0.0, 128
        %480 = vxpose.xlu0.b32.end [16/16] 0.0, 128
        %v481 = vpop.trf.xlu0
        %v482 = vpop.trf.xlu0
        %v483 = vpop.trf.xlu0
        %v484 = vpop.trf.xlu0
        %v485 = vpop.trf.xlu0
        %v486 = vpop.trf.xlu0
        %v487 = vpop.trf.xlu0
        %v488 = vpop.trf.xlu0
        %v489 = vpop.trf.xlu0
        %v490 = vpop.trf.xlu0
        %v491 = vpop.trf.xlu0
        %v492 = vpop.trf.xlu0
        %v493 = vpop.trf.xlu0
        %v494 = vpop.trf.xlu0
        %v495 = vpop.trf.xlu0
        %v496 = vpop.trf.xlu0
        %498 = vset.pattern.permute.xlu0 0
        %499 = vperm.xlu0 %498, %v481
        %v500 = vpop.permute.xlu0 %499
        %503 = vset.pattern.permute.xlu0 0
        %504 = vperm.xlu0 %503, %v482
        %v505 = vpop.permute.xlu0 %504
        %508 = vset.pattern.permute.xlu0 0
        %509 = vperm.xlu0 %508, %v483
        %v510 = vpop.permute.xlu0 %509
        %513 = vset.pattern.permute.xlu0 0
        %514 = vperm.xlu0 %513, %v484
        %v515 = vpop.permute.xlu0 %514
        %518 = vset.pattern.permute.xlu0 0
        %519 = vperm.xlu0 %518, %v485
        %v520 = vpop.permute.xlu0 %519
        %523 = vset.pattern.permute.xlu0 0
        %524 = vperm.xlu0 %523, %v486
        %v525 = vpop.permute.xlu0 %524
        %528 = vset.pattern.permute.xlu0 0
        %529 = vperm.xlu0 %528, %v487
        %v530 = vpop.permute.xlu0 %529
        %533 = vset.pattern.permute.xlu0 0
        %534 = vperm.xlu0 %533, %v488
        %v535 = vpop.permute.xlu0 %534
        %538 = vset.pattern.permute.xlu0 0
        %539 = vperm.xlu0 %538, %v489
        %v540 = vpop.permute.xlu0 %539
        %543 = vset.pattern.permute.xlu0 0
        %544 = vperm.xlu0 %543, %v490
        %v545 = vpop.permute.xlu0 %544
        %548 = vset.pattern.permute.xlu0 0
        %549 = vperm.xlu0 %548, %v491
        %v550 = vpop.permute.xlu0 %549
        %553 = vset.pattern.permute.xlu0 0
        %554 = vperm.xlu0 %553, %v492
        %v555 = vpop.permute.xlu0 %554
        %558 = vset.pattern.permute.xlu0 0
        %559 = vperm.xlu0 %558, %v493
        %v560 = vpop.permute.xlu0 %559
        %563 = vset.pattern.permute.xlu0 0
        %564 = vperm.xlu0 %563, %v494
        %v565 = vpop.permute.xlu0 %564
        %568 = vset.pattern.permute.xlu0 0
        %569 = vperm.xlu0 %568, %v495
        %v570 = vpop.permute.xlu0 %569
        %573 = vset.pattern.permute.xlu0 0
        %574 = vperm.xlu0 %573, %v496
        %v575 = vpop.permute.xlu0 %574
        %v577 = vmul.f32 %v449, %v500
        %v578 = vmul.f32 %v450, %v505
        %v579 = vmul.f32 %v451, %v510
        %v580 = vmul.f32 %v452, %v515
        %v581 = vmul.f32 %v453, %v520
        %v582 = vmul.f32 %v454, %v525
        %v583 = vmul.f32 %v455, %v530
        %v584 = vmul.f32 %v456, %v535
        %v585 = vmul.f32 %v457, %v540
        %v586 = vmul.f32 %v458, %v545
        %v587 = vmul.f32 %v459, %v550
        %v588 = vmul.f32 %v460, %v555
        %v589 = vmul.f32 %v461, %v560
        %v590 = vmul.f32 %v462, %v565
        %v591 = vmul.f32 %v463, %v570
        %v592 = vmul.f32 %v464, %v575
        %v593 = vadd.f32 %v577, 1.0
        %v594 = vadd.f32 %v578, 1.0
        %v595 = vadd.f32 %v579, 1.0
        %v596 = vadd.f32 %v580, 1.0
        %v597 = vadd.f32 %v581, 1.0
        %v598 = vadd.f32 %v582, 1.0
        %v599 = vadd.f32 %v583, 1.0
        %v600 = vadd.f32 %v584, 1.0
        %v601 = vadd.f32 %v585, 1.0
        %v602 = vadd.f32 %v586, 1.0
        %v603 = vadd.f32 %v587, 1.0
        %v604 = vadd.f32 %v588, 1.0
        %v605 = vadd.f32 %v589, 1.0
        %v606 = vadd.f32 %v590, 1.0
        %v607 = vadd.f32 %v591, 1.0
        %v608 = vadd.f32 %v592, 1.0
        %609 = vst [vmem:[%s176] sm:$0xff] %v593
        %610 = vst [vmem:[%s176 + $0x8] sm:$0xff] %v594
        %611 = vst [vmem:[%s176 + $0x10] sm:$0xff] %v595
        %612 = vst [vmem:[%s176 + $0x18] sm:$0xff] %v596
        %613 = vst [vmem:[%s176 + $0x20] sm:$0xff] %v597
        %614 = vst [vmem:[%s176 + $0x28] sm:$0xff] %v598
        %615 = vst [vmem:[%s176 + $0x30] sm:$0xff] %v599
        %616 = vst [vmem:[%s176 + $0x38] sm:$0xff] %v600
        %617 = vst [vmem:[%s176 + $0x40] sm:$0xff] %v601
        %618 = vst [vmem:[%s176 + $0x48] sm:$0xff] %v602
        %619 = vst [vmem:[%s176 + $0x50] sm:$0xff] %v603
        %620 = vst [vmem:[%s176 + $0x58] sm:$0xff] %v604
        %621 = vst [vmem:[%s176 + $0x60] sm:$0xff] %v605
        %622 = vst [vmem:[%s176 + $0x68] sm:$0xff] %v606
        %623 = vst [vmem:[%s176 + $0x70] sm:$0xff] %v607
        %624 = vst [vmem:[%s176 + $0x78] sm:$0xff] %v608
        %s625 = sand.u32 %s75, 1
        %s626 = scalar_lea.sflag [#allocation4], %s625
        %s627 = sand.u32 %s75, 1
        %s628 = smul.addr %s627, 128
        %s629 = scalar_lea.vmem [#allocation7], %s628
        // Predicated region
        $region37: #{tpu_custom_call.1} parent=27 // pred_check
          %p630 = pneg %p85
        $region38: #{tpu_custom_call.1} parent=27 // pred_check_branch
          %632 = sbr.rel (%p630) target = $region40
        $region39: #{tpu_custom_call.1} parent=27 // pred_region
          %s634 = ssub.s32 2048, 2048
          %635 = vsyncadd %s626, %s634
          %s636 = smul.addr %s20, 16
          %s637 = smul.addr %s636, 128
          %s638 = scalar_lea.hbm %s2, %s637
          %s639 = sshll.u32 %s629, 4
          %s640 = int_to_ptr.vmem [resolvable:$true] %s639
          %645 = dma.vmem_to_hbm [thread:$0]  %s640, 2048, %s638, %s626, 128, 128, 8
        $region40: #{tpu_custom_call.1} parent=27 // pred_fallthru
          _
      $region28: #{tpu_custom_call.1} parent=5 // pred_fallthru
        _
      %p646 = scmp.le.s32.totalorder 2, %s15
      // Predicated region
      $region41: #{tpu_custom_call.1} parent=5 // pred_check
        %p647 = pneg %p646
      $region42: #{tpu_custom_call.1} parent=5 // pred_check_branch
        %649 = sbr.rel (%p647) target = $region44
      $region43: #{tpu_custom_call.1} parent=5 // pred_region
        %s650 = ssub.s32 %s15, 2
        // Predicated region
        $region45: #{tpu_custom_call.1} parent=43 // pred_check
          %p651 = pneg %p91
        $region46: #{tpu_custom_call.1} parent=43 // pred_check_branch
          %653 = sbr.rel (%p651) target = $region48
        $region47: #{tpu_custom_call.1} parent=43 // pred_region
          %s654 = sand.u32 %s76, 1
          %s655 = scalar_lea.sflag [#allocation4], %s654
          %s656 = sand.u32 %s76, 1
          %s657 = smul.addr %s656, 128
          %s658 = scalar_lea.vmem [#allocation7], %s657
          %659 = dma.done %s655, 2048
        $region48: #{tpu_custom_call.1} parent=43 // pred_fallthru
          _
      $region44: #{tpu_custom_call.1} parent=5 // pred_fallthru
        _
    $region6: #{tpu_custom_call.1} parent=1 // loop_footer
      %s19 = sadd.s32 1, %s15
    $region7: #{tpu_custom_call.1} parent=1 // loop_footer_branch
      %14 = sbr.rel target = $region3
    $region8: #{tpu_custom_call.1} parent=1 // loop_exit
      _
    %660 = vsyncpa [#allocation3], 1
    %s661 = scalar_lea.sflag [#allocation3], 1
    %662 = vsyncpa %s661, 1
    %663 = vsyncpa [#allocation6], 1
    %664 = vsyncpa [#allocation4], 1
    %s665 = scalar_lea.sflag [#allocation4], 1
    %666 = vsyncpa %s665, 1

</llo_original>
